<compile_context>
chip_gen: v7x
topology: tpu7x:2x2x1
jax: 0.10.0
libtpu: 0.0.40
codegen_flags: <defaults>
</compile_context>

<pallas_src>
import functools

import jax
import jax.numpy as jnp
from jax.experimental import pallas as pl
from jax.experimental.pallas import tpu as pltpu

_BN_EPS = 1e-5
_MAX_LANE_TILE = 2048  # pixels (lanes) per block; small blocks, deep pipelining


def _conv1x1(w, x):
    """w: (Cout, Cin) f32, x: (Cin, T) f32 -> (Cout, T) f32.

    For tiny Cin the MXU is <2% utilized and push/drain latency dominates, so
    unroll the contraction as VPU multiply-adds; use the MXU otherwise.
    """
    cin = x.shape[0]
    if cin <= 8:
        acc = w[:, 0:1] * x[0:1, :]
        for c in range(1, cin):
            acc = acc + w[:, c:c + 1] * x[c:c + 1, :]
        return acc
    return jnp.dot(w, x, preferred_element_type=jnp.float32)


def _stats_kernel(x_ref, w_ref, sum_ref, sumsq_ref):
    # x_ref:   (1, Cin, T)  one batch element, one pixel tile (pixels on lanes)
    # w_ref:   (Cout, Cin)
    # sum_ref / sumsq_ref: (Cout, 1) accumulators, resident across the grid
    @pl.when((pl.program_id(0) == 0) & (pl.program_id(1) == 0))
    def _():
        sum_ref[...] = jnp.zeros_like(sum_ref)
        sumsq_ref[...] = jnp.zeros_like(sumsq_ref)

    z = _conv1x1(w_ref[...], x_ref[0])                      # (Cout, T)
    sum_ref[...] += jnp.sum(z, axis=1, keepdims=True)
    sumsq_ref[...] += jnp.sum(z * z, axis=1, keepdims=True)


def _norm_kernel(x_ref, ws_ref, shift_ref, o_ref):
    # x_ref:     (1, Cin, T)
    # ws_ref:    (Cout, Cin)  scale-folded weights: (gamma*rsqrt(var+eps)) * W
    # shift_ref: (Cout, 1)    beta - mean*scale
    # o_ref:     (1, Cout, T) lane-dense output (pixels on lanes)
    z = _conv1x1(ws_ref[...], x_ref[0])                     # (Cout, T)
    o_ref[0] = jnp.maximum(z + shift_ref[...], 0.0).astype(o_ref.dtype)


def _pick_lane_tile(hw):
    """Largest multiple-of-128 divisor of hw up to _MAX_LANE_TILE (or hw)."""
    if hw <= _MAX_LANE_TILE:
        return hw
    t = _MAX_LANE_TILE
    while t >= 128:
        if hw % t == 0:
            return t
        t -= 128
    return hw


@jax.jit
def lin_forward(x_nchw, conv_w, conv_b, bn_gamma, bn_beta):
    """x_nchw: (N, Cin, H, W); conv_w: (Cout, Cin, 1, 1); conv_b/gamma/beta: (Cout,)."""
    del conv_b  # per-channel bias cancels exactly in train-mode BN (z - mean)
    N, Cin, H, W = x_nchw.shape
    Cout = conv_w.shape[0]
    HW = H * W
    M = N * HW
    thw = _pick_lane_tile(HW)
    n_tiles = HW // thw

    x3 = x_nchw.reshape(N, Cin, HW).astype(jnp.float32)     # free reshape, no transpose
    w2 = conv_w.reshape(Cout, Cin).astype(jnp.float32)

    # ---- pass 1: per-channel sum / sum-of-squares of z = W @ x over all pixels
    ch_sum, ch_sumsq = pl.pallas_call(
        _stats_kernel,
        out_shape=(jax.ShapeDtypeStruct((Cout, 1), jnp.float32),
                   jax.ShapeDtypeStruct((Cout, 1), jnp.float32)),
        grid_spec=pltpu.PrefetchScalarGridSpec(
            num_scalar_prefetch=0,
            grid=(N, n_tiles),
            in_specs=[pl.BlockSpec((1, Cin, thw), lambda n, t: (n, 0, t)),
                      pl.BlockSpec((Cout, Cin), lambda n, t: (0, 0))],
            out_specs=(pl.BlockSpec((Cout, 1), lambda n, t: (0, 0)),
                       pl.BlockSpec((Cout, 1), lambda n, t: (0, 0))),
        ),
        compiler_params=pltpu.CompilerParams(
            dimension_semantics=("arbitrary", "arbitrary")),
    )(x3, w2)

    # ---- fold batch statistics + gamma/beta into an affine (scale, shift)
    mean = ch_sum / M
    var = ch_sumsq / M - mean * mean                         # biased (train-mode BN)
    scale = bn_gamma.reshape(Cout, 1).astype(jnp.float32) * jax.lax.rsqrt(var + _BN_EPS)
    shift = bn_beta.reshape(Cout, 1).astype(jnp.float32) - mean * scale
    w_scaled = w2 * scale                                    # (Cout, Cin)

    # ---- pass 2: out = relu((scale*W) @ x + shift), lane-dense stores
    out3 = pl.pallas_call(
        _norm_kernel,
        out_shape=jax.ShapeDtypeStruct((N, Cout, HW), jnp.float32),
        grid_spec=pltpu.PrefetchScalarGridSpec(
            num_scalar_prefetch=0,
            grid=(N, n_tiles),
            in_specs=[pl.BlockSpec((1, Cin, thw), lambda n, t: (n, 0, t)),
                      pl.BlockSpec((Cout, Cin), lambda n, t: (0, 0)),
                      pl.BlockSpec((Cout, 1), lambda n, t: (0, 0))],
            out_specs=pl.BlockSpec((1, Cout, thw), lambda n, t: (n, 0, t)),
        ),
        compiler_params=pltpu.CompilerParams(
            dimension_semantics=("parallel", "parallel")),
    )(x3, w_scaled, shift)

    return out3.reshape(N, Cout, H, W)


def _reference(x_nchw, conv_w, conv_b, bn_gamma, bn_beta):
    """Pure-JAX reference of conv1x1(+bias) + train-mode BN + ReLU (NCHW)."""
    y = jnp.einsum("nchw,oc->nohw", x_nchw, conv_w.reshape(conv_w.shape[0], -1))
    y = y + conv_b[None, :, None, None]
    mean = jnp.mean(y, axis=(0, 2, 3), keepdims=True)
    var = jnp.mean((y - mean) ** 2, axis=(0, 2, 3), keepdims=True)
    y_hat = (y - mean) / jnp.sqrt(var + _BN_EPS)
    out = y_hat * bn_gamma[None, :, None, None] + bn_beta[None, :, None, None]
    return jnp.maximum(out, 0.0)


if __name__ == "__main__":
    numIn, numOut = 4, 8
    N, H, W = 2, 16, 16

    key = jax.random.PRNGKey(0)
    kx, kw, kb = jax.random.split(key, 3)

    x = jax.random.normal(kx, (N, numIn, H, W), dtype=jnp.float32)

    # Deterministic params (uniform in [-1/sqrt(fan_in), 1/sqrt(fan_in)] like
    # nn.Conv2d's default; BN gamma=1, beta=0 as in PyTorch).
    bound = 1.0 / (numIn ** 0.5)
    conv_w = jax.random.uniform(kw, (numOut, numIn, 1, 1), jnp.float32, -bound, bound)
    conv_b = jax.random.uniform(kb, (numOut,), jnp.float32, -bound, bound)
    bn_gamma = jnp.ones((numOut,), jnp.float32)
    bn_beta = jnp.zeros((numOut,), jnp.float32)

    out = lin_forward(x, conv_w, conv_b, bn_gamma, bn_beta)
    out = jax.block_until_ready(out)

    ref = _reference(x, conv_w, conv_b, bn_gamma, bn_beta)
    assert out.shape == (N, numOut, H, W)
    assert jnp.allclose(out, ref, atol=1e-4, rtol=1e-4), "mismatch vs reference"

    # TODO(synk): BatchNorm running_mean/running_var bookkeeping (training-time
    # state update) is not part of the forward output and is not implemented.
    print("KERNEL_OK")
</pallas_src>

<mosaic_0001>
module attributes {stable_mosaic.version = 11 : i64} {
  func.func @_stats_kernel(%arg0: i32, %arg1: i32, %arg2: memref<1x4x256xf32, #tpu.memory_space<vmem>>, %arg3: memref<8x4xf32, #tpu.memory_space<vmem>>, %arg4: memref<8x1xf32, #tpu.memory_space<vmem>>, %arg5: memref<8x1xf32, #tpu.memory_space<vmem>>) attributes {dimension_semantics = [#tpu.dimension_semantics<arbitrary>, #tpu.dimension_semantics<arbitrary>], iteration_bounds = array<i64: 2, 1>, scalar_prefetch = 0 : i64, scratch_operands = 0 : i64, tpu.core_type = #tpu.core_type<tc>, window_params = [{transform_indices = @transform_0, window_bounds = array<i64: 1, 4, 256>}, {pipeline_mode = #tpu.pipeline_mode<synchronous>, transform_indices = @transform_1, window_bounds = array<i64: 8, 4>}, {pipeline_mode = #tpu.pipeline_mode<synchronous>, transform_indices = @transform_2, window_bounds = array<i64: 8, 1>}, {pipeline_mode = #tpu.pipeline_mode<synchronous>, transform_indices = @transform_3, window_bounds = array<i64: 8, 1>}]} {
    %c0_i32 = arith.constant 0 : i32
    %0 = arith.cmpi eq, %arg0, %c0_i32 : i32
    %c0_i32_0 = arith.constant 0 : i32
    %1 = arith.cmpi eq, %arg1, %c0_i32_0 : i32
    %2 = arith.andi %0, %1 : i1
    %3 = arith.extui %2 : i1 to i32
    %c0_i32_1 = arith.constant 0 : i32
    %4 = arith.cmpi ne, %3, %c0_i32_1 : i32
    scf.if %4 {
      %cst_15 = arith.constant 0.000000e+00 : f32
      %42 = vector.broadcast %cst_15 : f32 to vector<8x1xf32>
      %c0_16 = arith.constant 0 : index
      %c0_17 = arith.constant 0 : index
      %43 = vector.load %arg4[%c0_16, %c0_17] : memref<8x1xf32, #tpu.memory_space<vmem>>, vector<8x1xf32>
      tpu.vector_store %arg4[%c0_16, %c0_17], %42 {strides = array<i32>} : memref<8x1xf32, #tpu.memory_space<vmem>>, vector<8x1xf32>,
      %cst_18 = arith.constant 0.000000e+00 : f32
      %44 = vector.broadcast %cst_18 : f32 to vector<8x1xf32>
      %c0_19 = arith.constant 0 : index
      %c0_20 = arith.constant 0 : index
      %45 = vector.load %arg5[%c0_19, %c0_20] : memref<8x1xf32, #tpu.memory_space<vmem>>, vector<8x1xf32>
      tpu.vector_store %arg5[%c0_19, %c0_20], %44 {strides = array<i32>} : memref<8x1xf32, #tpu.memory_space<vmem>>, vector<8x1xf32>,
    } else {
    }
    %c0 = arith.constant 0 : index
    %c0_2 = arith.constant 0 : index
    %5 = vector.load %arg3[%c0, %c0_2] : memref<8x4xf32, #tpu.memory_space<vmem>>, vector<8x4xf32>
    %c0_3 = arith.constant 0 : index
    %c0_4 = arith.constant 0 : index
    %c0_5 = arith.constant 0 : index
    %6 = vector.load %arg2[%c0_3, %c0_4, %c0_5] : memref<1x4x256xf32, #tpu.memory_space<vmem>>, vector<1x4x256xf32>
    %7 = vector.shape_cast %6 : vector<1x4x256xf32> to vector<4x256xf32>
    %8 = vector.extract_strided_slice %5 {offsets = [0, 0], sizes = [8, 1], strides = [1, 1]} : vector<8x4xf32> to vector<8x1xf32>
    %9 = vector.extract_strided_slice %7 {offsets = [0, 0], sizes = [1, 256], strides = [1, 1]} : vector<4x256xf32> to vector<1x256xf32>
    %10 = vector.broadcast %8 : vector<8x1xf32> to vector<8x256xf32>
    %11 = vector.broadcast %9 : vector<1x256xf32> to vector<8x256xf32>
    %12 = arith.mulf %10, %11 : vector<8x256xf32>
    %13 = vector.extract_strided_slice %5 {offsets = [0, 1], sizes = [8, 1], strides = [1, 1]} : vector<8x4xf32> to vector<8x1xf32>
    %14 = vector.extract_strided_slice %7 {offsets = [1, 0], sizes = [1, 256], strides = [1, 1]} : vector<4x256xf32> to vector<1x256xf32>
    %15 = vector.broadcast %13 : vector<8x1xf32> to vector<8x256xf32>
    %16 = vector.broadcast %14 : vector<1x256xf32> to vector<8x256xf32>
    %17 = arith.mulf %15, %16 : vector<8x256xf32>
    %18 = arith.addf %12, %17 : vector<8x256xf32>
    %19 = vector.extract_strided_slice %5 {offsets = [0, 2], sizes = [8, 1], strides = [1, 1]} : vector<8x4xf32> to vector<8x1xf32>
    %20 = vector.extract_strided_slice %7 {offsets = [2, 0], sizes = [1, 256], strides = [1, 1]} : vector<4x256xf32> to vector<1x256xf32>
    %21 = vector.broadcast %19 : vector<8x1xf32> to vector<8x256xf32>
    %22 = vector.broadcast %20 : vector<1x256xf32> to vector<8x256xf32>
    %23 = arith.mulf %21, %22 : vector<8x256xf32>
    %24 = arith.addf %18, %23 : vector<8x256xf32>
    %25 = vector.extract_strided_slice %5 {offsets = [0, 3], sizes = [8, 1], strides = [1, 1]} : vector<8x4xf32> to vector<8x1xf32>
    %26 = vector.extract_strided_slice %7 {offsets = [3, 0], sizes = [1, 256], strides = [1, 1]} : vector<4x256xf32> to vector<1x256xf32>
    %27 = vector.broadcast %25 : vector<8x1xf32> to vector<8x256xf32>
    %28 = vector.broadcast %26 : vector<1x256xf32> to vector<8x256xf32>
    %29 = arith.mulf %27, %28 : vector<8x256xf32>
    %30 = arith.addf %24, %29 : vector<8x256xf32>
    %c0_6 = arith.constant 0 : index
    %c0_7 = arith.constant 0 : index
    %31 = vector.load %arg4[%c0_6, %c0_7] : memref<8x1xf32, #tpu.memory_space<vmem>>, vector<8x1xf32>
    %cst = arith.constant dense<0.000000e+00> : vector<8xf32>
    %32 = vector.multi_reduction <add>, %30, %cst [1] : vector<8x256xf32> to vector<8xf32>
    %33 = vector.shape_cast %32 : vector<8xf32> to vector<8x1xf32>
    %34 = arith.addf %31, %33 : vector<8x1xf32>
    %c0_8 = arith.constant 0 : index
    %c0_9 = arith.constant 0 : index
    %35 = vector.load %arg4[%c0_8, %c0_9] : memref<8x1xf32, #tpu.memory_space<vmem>>, vector<8x1xf32>
    tpu.vector_store %arg4[%c0_8, %c0_9], %34 {strides = array<i32>} : memref<8x1xf32, #tpu.memory_space<vmem>>, vector<8x1xf32>,
    %c0_10 = arith.constant 0 : index
    %c0_11 = arith.constant 0 : index
    %36 = vector.load %arg5[%c0_10, %c0_11] : memref<8x1xf32, #tpu.memory_space<vmem>>, vector<8x1xf32>
    %37 = arith.mulf %30, %30 : vector<8x256xf32>
    %cst_12 = arith.constant dense<0.000000e+00> : vector<8xf32>
    %38 = vector.multi_reduction <add>, %37, %cst_12 [1] : vector<8x256xf32> to vector<8xf32>
    %39 = vector.shape_cast %38 : vector<8xf32> to vector<8x1xf32>
    %40 = arith.addf %36, %39 : vector<8x1xf32>
    %c0_13 = arith.constant 0 : index
    %c0_14 = arith.constant 0 : index
    %41 = vector.load %arg5[%c0_13, %c0_14] : memref<8x1xf32, #tpu.memory_space<vmem>>, vector<8x1xf32>
    tpu.vector_store %arg5[%c0_13, %c0_14], %40 {strides = array<i32>} : memref<8x1xf32, #tpu.memory_space<vmem>>, vector<8x1xf32>,
    return
  }
  func.func @transform_0(%arg0: i32, %arg1: i32) -> (i32, i32, i32) {
    %c0_i32 = arith.constant 0 : i32
    %c0_i32_0 = arith.constant 0 : i32
    return %arg0, %c0_i32, %arg1 : i32, i32, i32
  }
  func.func @transform_1(%arg0: i32, %arg1: i32) -> (i32, i32) {
    %c0_i32 = arith.constant 0 : i32
    %c0_i32_0 = arith.constant 0 : i32
    %c0_i32_1 = arith.constant 0 : i32
    return %c0_i32, %c0_i32_0 : i32, i32
  }
  func.func @transform_2(%arg0: i32, %arg1: i32) -> (i32, i32) {
    %c0_i32 = arith.constant 0 : i32
    %c0_i32_0 = arith.constant 0 : i32
    %c0_i32_1 = arith.constant 0 : i32
    return %c0_i32, %c0_i32_0 : i32, i32
  }
  func.func @transform_3(%arg0: i32, %arg1: i32) -> (i32, i32) {
    %c0_i32 = arith.constant 0 : i32
    %c0_i32_0 = arith.constant 0 : i32
    %c0_i32_1 = arith.constant 0 : i32
    return %c0_i32, %c0_i32_0 : i32, i32
  }
}

module attributes {stable_mosaic.version = 11 : i64} {
  func.func @_norm_kernel(%arg0: i32, %arg1: i32, %arg2: memref<1x4x256xf32, #tpu.memory_space<vmem>>, %arg3: memref<8x4xf32, #tpu.memory_space<vmem>>, %arg4: memref<8x1xf32, #tpu.memory_space<vmem>>, %arg5: memref<1x8x256xf32, #tpu.memory_space<vmem>>) attributes {dimension_semantics = [#tpu.dimension_semantics<parallel>, #tpu.dimension_semantics<parallel>], iteration_bounds = array<i64: 2, 1>, scalar_prefetch = 0 : i64, scratch_operands = 0 : i64, tpu.core_type = #tpu.core_type<tc>, window_params = [{transform_indices = @transform_0, window_bounds = array<i64: 1, 4, 256>}, {pipeline_mode = #tpu.pipeline_mode<synchronous>, transform_indices = @transform_1, window_bounds = array<i64: 8, 4>}, {pipeline_mode = #tpu.pipeline_mode<synchronous>, transform_indices = @transform_2, window_bounds = array<i64: 8, 1>}, {transform_indices = @transform_3, window_bounds = array<i64: 1, 8, 256>}]} {
    %c0 = arith.constant 0 : index
    %c0_0 = arith.constant 0 : index
    %0 = vector.load %arg3[%c0, %c0_0] : memref<8x4xf32, #tpu.memory_space<vmem>>, vector<8x4xf32>
    %c0_1 = arith.constant 0 : index
    %c0_2 = arith.constant 0 : index
    %c0_3 = arith.constant 0 : index
    %1 = vector.load %arg2[%c0_1, %c0_2, %c0_3] : memref<1x4x256xf32, #tpu.memory_space<vmem>>, vector<1x4x256xf32>
    %2 = vector.shape_cast %1 : vector<1x4x256xf32> to vector<4x256xf32>
    %3 = vector.extract_strided_slice %0 {offsets = [0, 0], sizes = [8, 1], strides = [1, 1]} : vector<8x4xf32> to vector<8x1xf32>
    %4 = vector.extract_strided_slice %2 {offsets = [0, 0], sizes = [1, 256], strides = [1, 1]} : vector<4x256xf32> to vector<1x256xf32>
    %5 = vector.broadcast %3 : vector<8x1xf32> to vector<8x256xf32>
    %6 = vector.broadcast %4 : vector<1x256xf32> to vector<8x256xf32>
    %7 = arith.mulf %5, %6 : vector<8x256xf32>
    %8 = vector.extract_strided_slice %0 {offsets = [0, 1], sizes = [8, 1], strides = [1, 1]} : vector<8x4xf32> to vector<8x1xf32>
    %9 = vector.extract_strided_slice %2 {offsets = [1, 0], sizes = [1, 256], strides = [1, 1]} : vector<4x256xf32> to vector<1x256xf32>
    %10 = vector.broadcast %8 : vector<8x1xf32> to vector<8x256xf32>
    %11 = vector.broadcast %9 : vector<1x256xf32> to vector<8x256xf32>
    %12 = arith.mulf %10, %11 : vector<8x256xf32>
    %13 = arith.addf %7, %12 : vector<8x256xf32>
    %14 = vector.extract_strided_slice %0 {offsets = [0, 2], sizes = [8, 1], strides = [1, 1]} : vector<8x4xf32> to vector<8x1xf32>
    %15 = vector.extract_strided_slice %2 {offsets = [2, 0], sizes = [1, 256], strides = [1, 1]} : vector<4x256xf32> to vector<1x256xf32>
    %16 = vector.broadcast %14 : vector<8x1xf32> to vector<8x256xf32>
    %17 = vector.broadcast %15 : vector<1x256xf32> to vector<8x256xf32>
    %18 = arith.mulf %16, %17 : vector<8x256xf32>
    %19 = arith.addf %13, %18 : vector<8x256xf32>
    %20 = vector.extract_strided_slice %0 {offsets = [0, 3], sizes = [8, 1], strides = [1, 1]} : vector<8x4xf32> to vector<8x1xf32>
    %21 = vector.extract_strided_slice %2 {offsets = [3, 0], sizes = [1, 256], strides = [1, 1]} : vector<4x256xf32> to vector<1x256xf32>
    %22 = vector.broadcast %20 : vector<8x1xf32> to vector<8x256xf32>
    %23 = vector.broadcast %21 : vector<1x256xf32> to vector<8x256xf32>
    %24 = arith.mulf %22, %23 : vector<8x256xf32>
    %25 = arith.addf %19, %24 : vector<8x256xf32>
    %c0_4 = arith.constant 0 : index
    %c0_5 = arith.constant 0 : index
    %26 = vector.load %arg4[%c0_4, %c0_5] : memref<8x1xf32, #tpu.memory_space<vmem>>, vector<8x1xf32>
    %27 = vector.broadcast %26 : vector<8x1xf32> to vector<8x256xf32>
    %28 = arith.addf %25, %27 : vector<8x256xf32>
    %cst = arith.constant 0.000000e+00 : f32
    %29 = vector.broadcast %cst : f32 to vector<8x256xf32>
    %30 = arith.maximumf %28, %29 : vector<8x256xf32>
    %c0_6 = arith.constant 0 : index
    %c0_7 = arith.constant 0 : index
    %c0_8 = arith.constant 0 : index
    %31 = vector.load %arg5[%c0_6, %c0_7, %c0_8] : memref<1x8x256xf32, #tpu.memory_space<vmem>>, vector<1x8x256xf32>
    %32 = vector.shape_cast %31 : vector<1x8x256xf32> to vector<8x256xf32>
    %33 = vector.shape_cast %30 : vector<8x256xf32> to vector<1x8x256xf32>
    tpu.vector_store %arg5[%c0_6, %c0_7, %c0_8], %33 {strides = array<i32>} : memref<1x8x256xf32, #tpu.memory_space<vmem>>, vector<1x8x256xf32>,
    return
  }
  func.func @transform_0(%arg0: i32, %arg1: i32) -> (i32, i32, i32) {
    %c0_i32 = arith.constant 0 : i32
    %c0_i32_0 = arith.constant 0 : i32
    return %arg0, %c0_i32, %arg1 : i32, i32, i32
  }
  func.func @transform_1(%arg0: i32, %arg1: i32) -> (i32, i32) {
    %c0_i32 = arith.constant 0 : i32
    %c0_i32_0 = arith.constant 0 : i32
    %c0_i32_1 = arith.constant 0 : i32
    return %c0_i32, %c0_i32_0 : i32, i32
  }
  func.func @transform_2(%arg0: i32, %arg1: i32) -> (i32, i32) {
    %c0_i32 = arith.constant 0 : i32
    %c0_i32_0 = arith.constant 0 : i32
    %c0_i32_1 = arith.constant 0 : i32
    return %c0_i32, %c0_i32_0 : i32, i32
  }
  func.func @transform_3(%arg0: i32, %arg1: i32) -> (i32, i32, i32) {
    %c0_i32 = arith.constant 0 : i32
    %c0_i32_0 = arith.constant 0 : i32
    return %arg0, %c0_i32, %arg1 : i32, i32, i32
  }
}

</mosaic_0001>

<llo_original>
// kernel: lin_forward.2
$region0: #{lin_forward.2}
  #allocation0 [shape = 'u32[]', space=smem, size = 0x4, offset = 0x4, fixed_abs, tag = 'smem constant byte address 0x4 - core index']
  #allocation1 [shape = 'u32[144,128]{1,0:T(1,128)}', space=vmem, size = 0x12000, scoped, tag = 'internal scratch']
  %s0 = inlined_call_operand.vmem [shape: f32[2,4,256], index: 0, kind: input, shape index: {}]
  %s1 = inlined_call_operand.vmem [shape: f32[8,4], index: 1, kind: input, shape index: {}]
  %s2 = inlined_call_operand.vmem [shape: f32[8,1], index: 2, kind: output, shape index: {0}]
  %s3 = inlined_call_operand.vmem [shape: f32[8,1], index: 3, kind: output, shape index: {1}]
  %4 = xla_tuple %s2, %s3
  %s5 = sld [smem:[#allocation0]]
  $region53: #{lin_forward.2} parent=0
    _
  %s7 = ssub.s32 1, %s5
  %s8 = scalar_select 0, %s7, %s5
  loop: start=0, step=1, limit=4
  $region2: #{lin_forward.2} parent=0 // loop_pre_header
    _
  $region3: #{lin_forward.2} parent=0 // loop_header
    %s10 = sphi 0, %s14
    %p11 = scmp.ge.s32.totalorder %s10, 4
    %s17 = sphi 0, %s29
    %s18 = sphi 0, %s25
    %s19 = sphi 0, %s17
    %s20 = sphi 0, %s18
    %s21 = sphi 0, %s19
    %s22 = sphi 0, %s20
    %s34 = sphi 0, %s36
    %s37 = sphi 0, %s34
    %s38 = sphi 0, %s37
    %s54 = sphi 0, %s38
    %s58 = sphi 0, %s58
    %s60 = sphi 0, %s58
    %s61 = sphi 0, %s60
    %s75 = sphi 0, %s61
    %s79 = sphi 0, %s79
    %s81 = sphi 0, %s79
    %s82 = sphi 0, %s81
    %s96 = sphi 0, %s82
    %s100 = sphi 0, %s100
    %s102 = sphi 0, %s100
    %s103 = sphi 0, %s102
    %s117 = sphi 0, %s103
  $region4: #{lin_forward.2} parent=0 // loop_header_branch
    %13 = sbr.rel (%p11) target = $region8
  $region5: #{lin_forward.2} parent=0 // loop_body
    %s15 = ssub.s32 %s10, 1
    %s16 = ssub.s32 %s10, 2
    %s23 = sadd.s32 1, %s18
    %p24 = scmp.ge.s32.totalorder %s23, 1
    %s25 = scalar_select %p24, 0, %s23
    %s26 = sadd.s32 1, %s17
    %s27 = scalar_select %p24, %s26, %s17
    %p28 = scmp.ge.s32.totalorder %s27, 2
    %s29 = scalar_select %p28, 0, %s27
    %s30 = ssub.s32 %s17, %s29
    %s31 = ssub.s32 %s18, %s25
    %s32 = sor.u32 %s30, %s31
    %p33 = scmp.eq.s32.totalorder %s32, 0
    %s35 = sadd.s32 %s34, 1
    %s36 = scalar_select %p33, %s34, %s35
    %p39 = pneg %p33
    %p40 = scmp.eq.s32.totalorder %s10, 1
    %p41 = por %p39, %p40
    %p42 = scmp.ne.s32.totalorder %s34, %s37
    %p43 = scmp.eq.s32.totalorder %s10, 0
    %p44 = por %p42, %p43
    %p45 = scmp.ne.s32.totalorder %s34, %s37
    %p46 = scmp.eq.s32.totalorder %s15, 1
    %p47 = por %p45, %p46
    %p48 = scmp.ne.s32.totalorder %s37, %s38
    %p49 = scmp.eq.s32.totalorder %s15, 0
    %p50 = por %p48, %p49
    %p51 = scmp.ne.s32.totalorder %s37, %s38
    %p52 = scmp.eq.s32.totalorder %s16, 1
    %p53 = por %p51, %p52
    %p55 = scmp.ne.s32.totalorder %s38, %s54
    %p56 = scmp.eq.s32.totalorder %s16, 0
    %p57 = por %p55, %p56
    %s59 = sadd.s32 %s58, 1
    %p62 = scmp.eq.s32.totalorder %s10, 1
    %p63 = scmp.ne.s32.totalorder %s58, %s60
    %p64 = scmp.eq.s32.totalorder %s10, 0
    %p65 = por %p63, %p64
    %p66 = scmp.ne.s32.totalorder %s58, %s60
    %p67 = scmp.eq.s32.totalorder %s15, 1
    %p68 = por %p66, %p67
    %p69 = scmp.ne.s32.totalorder %s60, %s61
    %p70 = scmp.eq.s32.totalorder %s15, 0
    %p71 = por %p69, %p70
    %p72 = scmp.ne.s32.totalorder %s60, %s61
    %p73 = scmp.eq.s32.totalorder %s16, 1
    %p74 = por %p72, %p73
    %p76 = scmp.ne.s32.totalorder %s61, %s75
    %p77 = scmp.eq.s32.totalorder %s16, 0
    %p78 = por %p76, %p77
    %s80 = sadd.s32 %s79, 1
    %p83 = scmp.eq.s32.totalorder %s10, 1
    %p84 = scmp.ne.s32.totalorder %s79, %s81
    %p85 = scmp.eq.s32.totalorder %s10, 0
    %p86 = por %p84, %p85
    %p87 = scmp.ne.s32.totalorder %s79, %s81
    %p88 = scmp.eq.s32.totalorder %s15, 1
    %p89 = por %p87, %p88
    %p90 = scmp.ne.s32.totalorder %s81, %s82
    %p91 = scmp.eq.s32.totalorder %s15, 0
    %p92 = por %p90, %p91
    %p93 = scmp.ne.s32.totalorder %s81, %s82
    %p94 = scmp.eq.s32.totalorder %s16, 1
    %p95 = por %p93, %p94
    %p97 = scmp.ne.s32.totalorder %s82, %s96
    %p98 = scmp.eq.s32.totalorder %s16, 0
    %p99 = por %p97, %p98
    %s101 = sadd.s32 %s100, 1
    %p104 = scmp.eq.s32.totalorder %s10, 1
    %p105 = scmp.ne.s32.totalorder %s100, %s102
    %p106 = scmp.eq.s32.totalorder %s10, 0
    %p107 = por %p105, %p106
    %p108 = scmp.ne.s32.totalorder %s100, %s102
    %p109 = scmp.eq.s32.totalorder %s15, 1
    %p110 = por %p108, %p109
    %p111 = scmp.ne.s32.totalorder %s102, %s103
    %p112 = scmp.eq.s32.totalorder %s15, 0
    %p113 = por %p111, %p112
    %p114 = scmp.ne.s32.totalorder %s102, %s103
    %p115 = scmp.eq.s32.totalorder %s16, 1
    %p116 = por %p114, %p115
    %p118 = scmp.ne.s32.totalorder %s103, %s117
    %p119 = scmp.eq.s32.totalorder %s16, 0
    %p120 = por %p118, %p119
    %p121 = scmp.le.s32.totalorder 1, %s10
    %p122 = scmp.lt.s32.totalorder %s10, 3
    %p123 = pnand %p121, %p122
    %p124 = pneg %p123
    // Predicated region
    $region9: #{lin_forward.2} parent=5 // pred_check
      _
    $region10: #{lin_forward.2} parent=5 // pred_check_branch
      %126 = sbr.rel (%p123) target = $region12
    $region11: #{lin_forward.2} parent=5 // pred_region
      %s127 = ssub.s32 %s10, 1
      // Predicated region
      $region13: #{lin_forward.2} parent=11 // pred_check
        %p128 = pneg %p71
      $region14: #{lin_forward.2} parent=11 // pred_check_branch
        %130 = sbr.rel (%p128) target = $region16
      $region15: #{lin_forward.2} parent=11 // pred_region
        _
      $region16: #{lin_forward.2} parent=11 // pred_fallthru
        _
    $region12: #{lin_forward.2} parent=5 // pred_fallthru
      _
    %p131 = scmp.lt.s32.totalorder %s10, 2
    // Predicated region
    $region17: #{lin_forward.2} parent=5 // pred_check
      %p132 = pneg %p131
    $region18: #{lin_forward.2} parent=5 // pred_check_branch
      %134 = sbr.rel (%p132) target = $region20
    $region19: #{lin_forward.2} parent=5 // pred_region
      // Predicated region
      $region21: #{lin_forward.2} parent=19 // pred_check
        %p135 = pneg %p44
      $region22: #{lin_forward.2} parent=19 // pred_check_branch
        %137 = sbr.rel (%p135) target = $region24
      $region23: #{lin_forward.2} parent=19 // pred_region
        %s138 = smul.u32 2, %s18
        %p139 = scmp.lt.s32.totalorder %s17, 1
        %s140 = scalar_select %p139, %s17, 1
        %p141 = scmp.lt.s32.totalorder %s138, 1
        %s142 = scalar_select %p141, %s138, 1
        %s143 = smul.addr %s140, 2
        %s144 = sadd.s32 %s142, %s143
        %s145 = smul.addr %s144, 4
        %s146 = scalar_lea.vmem %s0, %s145
        %s147 = smul.u32 2, %s18
      $region24: #{lin_forward.2} parent=19 // pred_fallthru
        _
    $region20: #{lin_forward.2} parent=5 // pred_fallthru
      _
    %p148 = scmp.le.s32.totalorder 1, %s10
    %p149 = scmp.lt.s32.totalorder %s10, 3
    %p150 = pnand %p148, %p149
    %p151 = pneg %p150
    // Predicated region
    $region25: #{lin_forward.2} parent=5 // pred_check
      _
    $region26: #{lin_forward.2} parent=5 // pred_check_branch
      %153 = sbr.rel (%p150) target = $region28
    $region27: #{lin_forward.2} parent=5 // pred_region
      %s154 = ssub.s32 %s10, 1
      %s155 = smul.u32 2, %s20
      %p156 = scmp.lt.s32.totalorder %s19, 1
      %s157 = scalar_select %p156, %s19, 1
      %p158 = scmp.lt.s32.totalorder %s155, 1
      %s159 = scalar_select %p158, %s155, 1
      %s160 = smul.addr %s157, 2
      %s161 = sadd.s32 %s159, %s160
      %s162 = smul.addr %s161, 4
      %s163 = scalar_lea.vmem %s0, %s162
      %p164 = pneg %p50
      %p165 = pneg %p47
      %p166 = pneg %p71
      %p167 = pneg %p68
      %p168 = pneg %p92
      %p169 = pneg %p89
      %p170 = pneg %p113
      %p171 = pneg %p110
      %s172 = smul.u32 2, %s20
      %p173 = scmp.lt.s32.totalorder %s19, 1
      %s174 = scalar_select %p173, %s19, 1
      %p175 = scmp.lt.s32.totalorder %s172, 1
      %s176 = scalar_select %p175, %s172, 1
      %s177 = smul.addr %s174, 2
      %s178 = sadd.s32 %s176, %s177
      %s179 = smul.addr %s178, 4
      %s180 = scalar_lea.vmem %s0, %s179
      %s181 = smul.u32 2, %s20
      %p182 = scmp.eq.s32.totalorder %s19, 0
      %p183 = scmp.eq.s32.totalorder %s20, 0
      %p184 = pnand %p182, %p183
      %p185 = pneg %p184
      // Predicated region
      $region29: #{lin_forward.2} parent=27 // pred_check
        _
      $region30: #{lin_forward.2} parent=27 // pred_check_branch
        %187 = sbr.rel (%p184) target = $region32
      $region31: #{lin_forward.2} parent=27 // pred_region
        %vm188 = vcmask 7168
        %189 = vst.msk [vmem:[%s2] sm:$0xff] %vm188, 0.0
        %190 = vst.msk [vmem:[%s3] sm:$0xff] %vm188, 0.0
      $region32: #{lin_forward.2} parent=27 // pred_fallthru
        _
      %v191 = vld [vmem:[%s1] sm:$0xff]
      %v192 = vld [vmem:[%s180] sm:$0xff]
      %194 = vset.pattern.permute.xlu0 0
      %195 = vperm.xlu0 %194, %v191
      %v196 = vpop.permute.xlu0 %195
      %v199 = vlaneseq
      %v200 = vshrl.u32 %v199, 7
      %v201 = vsub.s32 0, %v200
      %v202 = vrot.slane %v192, %v201
      %v203 = vlaneseq
      %v204 = vshrl.u32 %v203, 7
      %v205 = vsub.s32 4, %v204
      %v206 = vrot.slane %v192, %v205
      %v209 = vlaneseq
      %v210 = vshrl.u32 %v209, 7
      %v211 = vsub.s32 0, %v210
      %v212 = vrot.slane %v202, %v211
      %v213 = vlaneseq
      %v214 = vshrl.u32 %v213, 7
      %v215 = vsub.s32 0, %v214
      %v216 = vrot.slane %v206, %v215
      %v217 = vmul.f32 %v196, %v212
      %v218 = vmul.f32 %v196, %v216
      %219 = vset.pattern.permute.xlu0 1
      %220 = vperm.xlu0 %219, %v191
      %v221 = vpop.permute.xlu0 %220
      %v223 = vlaneseq
      %v224 = vshrl.u32 %v223, 7
      %v225 = vsub.s32 1, %v224
      %v226 = vrot.slane %v192, %v225
      %v227 = vlaneseq
      %v228 = vshrl.u32 %v227, 7
      %v229 = vsub.s32 5, %v228
      %v230 = vrot.slane %v192, %v229
      %v233 = vlaneseq
      %v234 = vshrl.u32 %v233, 7
      %v235 = vsub.s32 1, %v234
      %v236 = vrot.slane %v226, %v235
      %v237 = vlaneseq
      %v238 = vshrl.u32 %v237, 7
      %v239 = vsub.s32 1, %v238
      %v240 = vrot.slane %v230, %v239
      %v241 = vmul.f32 %v221, %v236
      %v242 = vmul.f32 %v221, %v240
      %v243 = vadd.f32 %v217, %v241
      %v244 = vadd.f32 %v218, %v242
      %245 = vset.pattern.permute.xlu0 2
      %246 = vperm.xlu0 %245, %v191
      %v247 = vpop.permute.xlu0 %246
      %v249 = vlaneseq
      %v250 = vshrl.u32 %v249, 7
      %v251 = vsub.s32 2, %v250
      %v252 = vrot.slane %v192, %v251
      %v253 = vlaneseq
      %v254 = vshrl.u32 %v253, 7
      %v255 = vsub.s32 6, %v254
      %v256 = vrot.slane %v192, %v255
      %v259 = vlaneseq
      %v260 = vshrl.u32 %v259, 7
      %v261 = vsub.s32 2, %v260
      %v262 = vrot.slane %v252, %v261
      %v263 = vlaneseq
      %v264 = vshrl.u32 %v263, 7
      %v265 = vsub.s32 2, %v264
      %v266 = vrot.slane %v256, %v265
      %v267 = vmul.f32 %v247, %v262
      %v268 = vmul.f32 %v247, %v266
      %v269 = vadd.f32 %v243, %v267
      %v270 = vadd.f32 %v244, %v268
      %271 = vset.pattern.permute.xlu0 3
      %272 = vperm.xlu0 %271, %v191
      %v273 = vpop.permute.xlu0 %272
      %v275 = vlaneseq
      %v276 = vshrl.u32 %v275, 7
      %v277 = vsub.s32 3, %v276
      %v278 = vrot.slane %v192, %v277
      %v279 = vlaneseq
      %v280 = vshrl.u32 %v279, 7
      %v281 = vsub.s32 7, %v280
      %v282 = vrot.slane %v192, %v281
      %v285 = vlaneseq
      %v286 = vshrl.u32 %v285, 7
      %v287 = vsub.s32 3, %v286
      %v288 = vrot.slane %v278, %v287
      %v289 = vlaneseq
      %v290 = vshrl.u32 %v289, 7
      %v291 = vsub.s32 3, %v290
      %v292 = vrot.slane %v282, %v291
      %v293 = vmul.f32 %v273, %v288
      %v294 = vmul.f32 %v273, %v292
      %v295 = vadd.f32 %v269, %v293
      %v296 = vadd.f32 %v270, %v294
      %v297 = vld [vmem:[%s2] sm:$0xff]
      %v298 = vadd.f32 %v295, %v296
      %299 = vadd.xlane.f32.xlu0 %v298
      %v300 = vpop.xlane.xlu0 %299
      %v301 = vadd.f32 %v297, %v300
      %vm302 = vcmask 7168
      %303 = vst.msk [vmem:[%s2] sm:$0xff] %vm302, %v301
      %v304 = vld [vmem:[%s3] sm:$0xff]
      %v305 = vmul.f32 %v295, %v295
      %v306 = vmul.f32 %v296, %v296
      %v307 = vadd.f32 %v305, %v306
      %308 = vadd.xlane.f32.xlu0 %v307
      %v309 = vpop.xlane.xlu0 %308
      %v310 = vadd.f32 %v304, %v309
      %311 = vst.msk [vmem:[%s3] sm:$0xff] %vm302, %v310
      // Predicated region
      $region33: #{lin_forward.2} parent=27 // pred_check
        %p312 = pneg %p89
      $region34: #{lin_forward.2} parent=27 // pred_check_branch
        %314 = sbr.rel (%p312) target = $region36
      $region35: #{lin_forward.2} parent=27 // pred_region
        _
      $region36: #{lin_forward.2} parent=27 // pred_fallthru
        _
      // Predicated region
      $region37: #{lin_forward.2} parent=27 // pred_check
        %p315 = pneg %p110
      $region38: #{lin_forward.2} parent=27 // pred_check_branch
        %317 = sbr.rel (%p315) target = $region40
      $region39: #{lin_forward.2} parent=27 // pred_region
        _
      $region40: #{lin_forward.2} parent=27 // pred_fallthru
        _
      // Predicated region
      $region41: #{lin_forward.2} parent=27 // pred_check
        %p318 = pneg %p89
      $region42: #{lin_forward.2} parent=27 // pred_check_branch
        %320 = sbr.rel (%p318) target = $region44
      $region43: #{lin_forward.2} parent=27 // pred_region
        _
      $region44: #{lin_forward.2} parent=27 // pred_fallthru
        _
      // Predicated region
      $region45: #{lin_forward.2} parent=27 // pred_check
        %p321 = pneg %p110
      $region46: #{lin_forward.2} parent=27 // pred_check_branch
        %323 = sbr.rel (%p321) target = $region48
      $region47: #{lin_forward.2} parent=27 // pred_region
        _
      $region48: #{lin_forward.2} parent=27 // pred_fallthru
        _
    $region28: #{lin_forward.2} parent=5 // pred_fallthru
      _
    %p324 = scmp.le.s32.totalorder 2, %s10
    // Predicated region
    $region49: #{lin_forward.2} parent=5 // pred_check
      %p325 = pneg %p324
    $region50: #{lin_forward.2} parent=5 // pred_check_branch
      %327 = sbr.rel (%p325) target = $region52
    $region51: #{lin_forward.2} parent=5 // pred_region
      %s328 = ssub.s32 %s10, 2
    $region52: #{lin_forward.2} parent=5 // pred_fallthru
      _
  $region6: #{lin_forward.2} parent=0 // loop_footer
    %s14 = sadd.s32 1, %s10
  $region7: #{lin_forward.2} parent=0 // loop_footer_branch
    %9 = sbr.rel target = $region3
  $region8: #{lin_forward.2} parent=0 // loop_exit
    _

// kernel: lin_forward.3
$region0: #{lin_forward.3}
  #allocation0 [shape = 'u32[]', space=smem, size = 0x4, offset = 0x4, fixed_abs, tag = 'smem constant byte address 0x4 - core index']
  #allocation1 [shape = 'u32[144,128]{1,0:T(1,128)}', space=vmem, size = 0x12000, scoped, tag = 'internal scratch']
  %s0 = inlined_call_operand.vmem [shape: f32[2,4,256], index: 0, kind: input, shape index: {}]
  %s1 = inlined_call_operand.vmem [shape: f32[8,4], index: 1, kind: input, shape index: {}]
  %s2 = inlined_call_operand.vmem [shape: f32[8,1], index: 2, kind: input, shape index: {}]
  %s3 = inlined_call_operand.vmem [shape: f32[2,8,256], index: 3, kind: output, shape index: {}]
  %s4 = sld [smem:[#allocation0]]
  $region45: #{lin_forward.3} parent=0
    _
  %s6 = ssub.s32 1, %s4
  %s7 = scalar_select 0, %s6, %s4
  loop: start=0, step=1, limit=4
  $region2: #{lin_forward.3} parent=0 // loop_pre_header
    _
  $region3: #{lin_forward.3} parent=0 // loop_header
    %s9 = sphi 0, %s13
    %p10 = scmp.ge.s32.totalorder %s9, 4
    %s16 = sphi 0, %s28
    %s17 = sphi 0, %s24
    %s18 = sphi 0, %s16
    %s19 = sphi 0, %s17
    %s20 = sphi 0, %s18
    %s21 = sphi 0, %s19
    %s33 = sphi 0, %s35
    %s36 = sphi 0, %s33
    %s37 = sphi 0, %s36
    %s53 = sphi 0, %s37
    %s57 = sphi 0, %s57
    %s59 = sphi 0, %s57
    %s60 = sphi 0, %s59
    %s74 = sphi 0, %s60
    %s78 = sphi 0, %s78
    %s80 = sphi 0, %s78
    %s81 = sphi 0, %s80
    %s95 = sphi 0, %s81
    %s103 = sphi 0, %s105
    %s106 = sphi 0, %s103
    %s107 = sphi 0, %s106
    %s123 = sphi 0, %s107
  $region4: #{lin_forward.3} parent=0 // loop_header_branch
    %12 = sbr.rel (%p10) target = $region8
  $region5: #{lin_forward.3} parent=0 // loop_body
    %s14 = ssub.s32 %s9, 1
    %s15 = ssub.s32 %s9, 2
    %s22 = sadd.s32 1, %s17
    %p23 = scmp.ge.s32.totalorder %s22, 1
    %s24 = scalar_select %p23, 0, %s22
    %s25 = sadd.s32 1, %s16
    %s26 = scalar_select %p23, %s25, %s16
    %p27 = scmp.ge.s32.totalorder %s26, 2
    %s28 = scalar_select %p27, 0, %s26
    %s29 = ssub.s32 %s16, %s28
    %s30 = ssub.s32 %s17, %s24
    %s31 = sor.u32 %s29, %s30
    %p32 = scmp.eq.s32.totalorder %s31, 0
    %s34 = sadd.s32 %s33, 1
    %s35 = scalar_select %p32, %s33, %s34
    %p38 = pneg %p32
    %p39 = scmp.eq.s32.totalorder %s9, 1
    %p40 = por %p38, %p39
    %p41 = scmp.ne.s32.totalorder %s33, %s36
    %p42 = scmp.eq.s32.totalorder %s9, 0
    %p43 = por %p41, %p42
    %p44 = scmp.ne.s32.totalorder %s33, %s36
    %p45 = scmp.eq.s32.totalorder %s14, 1
    %p46 = por %p44, %p45
    %p47 = scmp.ne.s32.totalorder %s36, %s37
    %p48 = scmp.eq.s32.totalorder %s14, 0
    %p49 = por %p47, %p48
    %p50 = scmp.ne.s32.totalorder %s36, %s37
    %p51 = scmp.eq.s32.totalorder %s15, 1
    %p52 = por %p50, %p51
    %p54 = scmp.ne.s32.totalorder %s37, %s53
    %p55 = scmp.eq.s32.totalorder %s15, 0
    %p56 = por %p54, %p55
    %s58 = sadd.s32 %s57, 1
    %p61 = scmp.eq.s32.totalorder %s9, 1
    %p62 = scmp.ne.s32.totalorder %s57, %s59
    %p63 = scmp.eq.s32.totalorder %s9, 0
    %p64 = por %p62, %p63
    %p65 = scmp.ne.s32.totalorder %s57, %s59
    %p66 = scmp.eq.s32.totalorder %s14, 1
    %p67 = por %p65, %p66
    %p68 = scmp.ne.s32.totalorder %s59, %s60
    %p69 = scmp.eq.s32.totalorder %s14, 0
    %p70 = por %p68, %p69
    %p71 = scmp.ne.s32.totalorder %s59, %s60
    %p72 = scmp.eq.s32.totalorder %s15, 1
    %p73 = por %p71, %p72
    %p75 = scmp.ne.s32.totalorder %s60, %s74
    %p76 = scmp.eq.s32.totalorder %s15, 0
    %p77 = por %p75, %p76
    %s79 = sadd.s32 %s78, 1
    %p82 = scmp.eq.s32.totalorder %s9, 1
    %p83 = scmp.ne.s32.totalorder %s78, %s80
    %p84 = scmp.eq.s32.totalorder %s9, 0
    %p85 = por %p83, %p84
    %p86 = scmp.ne.s32.totalorder %s78, %s80
    %p87 = scmp.eq.s32.totalorder %s14, 1
    %p88 = por %p86, %p87
    %p89 = scmp.ne.s32.totalorder %s80, %s81
    %p90 = scmp.eq.s32.totalorder %s14, 0
    %p91 = por %p89, %p90
    %p92 = scmp.ne.s32.totalorder %s80, %s81
    %p93 = scmp.eq.s32.totalorder %s15, 1
    %p94 = por %p92, %p93
    %p96 = scmp.ne.s32.totalorder %s81, %s95
    %p97 = scmp.eq.s32.totalorder %s15, 0
    %p98 = por %p96, %p97
    %s99 = ssub.s32 %s16, %s28
    %s100 = ssub.s32 %s17, %s24
    %s101 = sor.u32 %s99, %s100
    %p102 = scmp.eq.s32.totalorder %s101, 0
    %s104 = sadd.s32 %s103, 1
    %s105 = scalar_select %p102, %s103, %s104
    %p108 = pneg %p102
    %p109 = scmp.eq.s32.totalorder %s9, 1
    %p110 = por %p108, %p109
    %p111 = scmp.ne.s32.totalorder %s103, %s106
    %p112 = scmp.eq.s32.totalorder %s9, 0
    %p113 = por %p111, %p112
    %p114 = scmp.ne.s32.totalorder %s103, %s106
    %p115 = scmp.eq.s32.totalorder %s14, 1
    %p116 = por %p114, %p115
    %p117 = scmp.ne.s32.totalorder %s106, %s107
    %p118 = scmp.eq.s32.totalorder %s14, 0
    %p119 = por %p117, %p118
    %p120 = scmp.ne.s32.totalorder %s106, %s107
    %p121 = scmp.eq.s32.totalorder %s15, 1
    %p122 = por %p120, %p121
    %p124 = scmp.ne.s32.totalorder %s107, %s123
    %p125 = scmp.eq.s32.totalorder %s15, 0
    %p126 = por %p124, %p125
    %p127 = scmp.le.s32.totalorder 1, %s9
    %p128 = scmp.lt.s32.totalorder %s9, 3
    %p129 = pnand %p127, %p128
    %p130 = pneg %p129
    // Predicated region
    $region9: #{lin_forward.3} parent=5 // pred_check
      _
    $region10: #{lin_forward.3} parent=5 // pred_check_branch
      %132 = sbr.rel (%p129) target = $region12
    $region11: #{lin_forward.3} parent=5 // pred_region
      %s133 = ssub.s32 %s9, 1
      // Predicated region
      $region13: #{lin_forward.3} parent=11 // pred_check
        %p134 = pneg %p70
      $region14: #{lin_forward.3} parent=11 // pred_check_branch
        %136 = sbr.rel (%p134) target = $region16
      $region15: #{lin_forward.3} parent=11 // pred_region
        _
      $region16: #{lin_forward.3} parent=11 // pred_fallthru
        _
      // Predicated region
      $region17: #{lin_forward.3} parent=11 // pred_check
        %p137 = pneg %p91
      $region18: #{lin_forward.3} parent=11 // pred_check_branch
        %139 = sbr.rel (%p137) target = $region20
      $region19: #{lin_forward.3} parent=11 // pred_region
        _
      $region20: #{lin_forward.3} parent=11 // pred_fallthru
        _
    $region12: #{lin_forward.3} parent=5 // pred_fallthru
      _
    %p140 = scmp.lt.s32.totalorder %s9, 2
    // Predicated region
    $region21: #{lin_forward.3} parent=5 // pred_check
      %p141 = pneg %p140
    $region22: #{lin_forward.3} parent=5 // pred_check_branch
      %143 = sbr.rel (%p141) target = $region24
    $region23: #{lin_forward.3} parent=5 // pred_region
      // Predicated region
      $region25: #{lin_forward.3} parent=23 // pred_check
        %p144 = pneg %p43
      $region26: #{lin_forward.3} parent=23 // pred_check_branch
        %146 = sbr.rel (%p144) target = $region28
      $region27: #{lin_forward.3} parent=23 // pred_region
        %s147 = smul.u32 2, %s17
        %p148 = scmp.lt.s32.totalorder %s16, 1
        %s149 = scalar_select %p148, %s16, 1
        %p150 = scmp.lt.s32.totalorder %s147, 1
        %s151 = scalar_select %p150, %s147, 1
        %s152 = smul.addr %s149, 2
        %s153 = sadd.s32 %s151, %s152
        %s154 = smul.addr %s153, 4
        %s155 = scalar_lea.vmem %s0, %s154
        %s156 = smul.u32 2, %s17
      $region28: #{lin_forward.3} parent=23 // pred_fallthru
        _
    $region24: #{lin_forward.3} parent=5 // pred_fallthru
      _
    %p157 = scmp.le.s32.totalorder 1, %s9
    %p158 = scmp.lt.s32.totalorder %s9, 3
    %p159 = pnand %p157, %p158
    %p160 = pneg %p159
    // Predicated region
    $region29: #{lin_forward.3} parent=5 // pred_check
      _
    $region30: #{lin_forward.3} parent=5 // pred_check_branch
      %162 = sbr.rel (%p159) target = $region32
    $region31: #{lin_forward.3} parent=5 // pred_region
      %s163 = ssub.s32 %s9, 1
      %s164 = smul.u32 2, %s19
      %p165 = scmp.lt.s32.totalorder %s18, 1
      %s166 = scalar_select %p165, %s18, 1
      %p167 = scmp.lt.s32.totalorder %s164, 1
      %s168 = scalar_select %p167, %s164, 1
      %s169 = smul.addr %s166, 2
      %s170 = sadd.s32 %s168, %s169
      %s171 = smul.addr %s170, 4
      %s172 = scalar_lea.vmem %s0, %s171
      %p173 = pneg %p49
      %p174 = pneg %p46
      %p175 = pneg %p70
      %p176 = pneg %p67
      %p177 = pneg %p91
      %p178 = pneg %p88
      %p179 = pneg %p119
      %p180 = pneg %p116
      %s181 = smul.u32 2, %s19
      %p182 = scmp.lt.s32.totalorder %s18, 1
      %s183 = scalar_select %p182, %s18, 1
      %p184 = scmp.lt.s32.totalorder %s181, 1
      %s185 = scalar_select %p184, %s181, 1
      %s186 = smul.addr %s183, 2
      %s187 = sadd.s32 %s185, %s186
      %s188 = smul.addr %s187, 8
      %s189 = scalar_lea.vmem %s3, %s188
      %s190 = smul.u32 2, %s19
      %p191 = scmp.lt.s32.totalorder %s18, 1
      %s192 = scalar_select %p191, %s18, 1
      %p193 = scmp.lt.s32.totalorder %s190, 1
      %s194 = scalar_select %p193, %s190, 1
      %s195 = smul.addr %s192, 2
      %s196 = sadd.s32 %s194, %s195
      %s197 = smul.addr %s196, 4
      %s198 = scalar_lea.vmem %s0, %s197
      %s199 = smul.u32 2, %s19
      %s200 = smul.u32 2, %s19
      %p201 = scmp.lt.s32.totalorder %s18, 1
      %s202 = scalar_select %p201, %s18, 1
      %p203 = scmp.lt.s32.totalorder %s200, 1
      %s204 = scalar_select %p203, %s200, 1
      %s205 = smul.addr %s202, 2
      %s206 = sadd.s32 %s204, %s205
      %s207 = smul.addr %s206, 8
      %s208 = scalar_lea.vmem %s3, %s207
      %s209 = smul.u32 2, %s19
      %v210 = vld [vmem:[%s1] sm:$0xff]
      %v211 = vld [vmem:[%s198] sm:$0xff]
      %213 = vset.pattern.permute.xlu0 0
      %214 = vperm.xlu0 %213, %v210
      %v215 = vpop.permute.xlu0 %214
      %v218 = vlaneseq
      %v219 = vshrl.u32 %v218, 7
      %v220 = vsub.s32 0, %v219
      %v221 = vrot.slane %v211, %v220
      %v222 = vlaneseq
      %v223 = vshrl.u32 %v222, 7
      %v224 = vsub.s32 4, %v223
      %v225 = vrot.slane %v211, %v224
      %v228 = vlaneseq
      %v229 = vshrl.u32 %v228, 7
      %v230 = vsub.s32 0, %v229
      %v231 = vrot.slane %v221, %v230
      %v232 = vlaneseq
      %v233 = vshrl.u32 %v232, 7
      %v234 = vsub.s32 0, %v233
      %v235 = vrot.slane %v225, %v234
      %v236 = vmul.f32 %v215, %v231
      %v237 = vmul.f32 %v215, %v235
      %238 = vset.pattern.permute.xlu0 1
      %239 = vperm.xlu0 %238, %v210
      %v240 = vpop.permute.xlu0 %239
      %v242 = vlaneseq
      %v243 = vshrl.u32 %v242, 7
      %v244 = vsub.s32 1, %v243
      %v245 = vrot.slane %v211, %v244
      %v246 = vlaneseq
      %v247 = vshrl.u32 %v246, 7
      %v248 = vsub.s32 5, %v247
      %v249 = vrot.slane %v211, %v248
      %v252 = vlaneseq
      %v253 = vshrl.u32 %v252, 7
      %v254 = vsub.s32 1, %v253
      %v255 = vrot.slane %v245, %v254
      %v256 = vlaneseq
      %v257 = vshrl.u32 %v256, 7
      %v258 = vsub.s32 1, %v257
      %v259 = vrot.slane %v249, %v258
      %v260 = vmul.f32 %v240, %v255
      %v261 = vmul.f32 %v240, %v259
      %v262 = vadd.f32 %v236, %v260
      %v263 = vadd.f32 %v237, %v261
      %264 = vset.pattern.permute.xlu0 2
      %265 = vperm.xlu0 %264, %v210
      %v266 = vpop.permute.xlu0 %265
      %v268 = vlaneseq
      %v269 = vshrl.u32 %v268, 7
      %v270 = vsub.s32 2, %v269
      %v271 = vrot.slane %v211, %v270
      %v272 = vlaneseq
      %v273 = vshrl.u32 %v272, 7
      %v274 = vsub.s32 6, %v273
      %v275 = vrot.slane %v211, %v274
      %v278 = vlaneseq
      %v279 = vshrl.u32 %v278, 7
      %v280 = vsub.s32 2, %v279
      %v281 = vrot.slane %v271, %v280
      %v282 = vlaneseq
      %v283 = vshrl.u32 %v282, 7
      %v284 = vsub.s32 2, %v283
      %v285 = vrot.slane %v275, %v284
      %v286 = vmul.f32 %v266, %v281
      %v287 = vmul.f32 %v266, %v285
      %v288 = vadd.f32 %v262, %v286
      %v289 = vadd.f32 %v263, %v287
      %290 = vset.pattern.permute.xlu0 3
      %291 = vperm.xlu0 %290, %v210
      %v292 = vpop.permute.xlu0 %291
      %v294 = vlaneseq
      %v295 = vshrl.u32 %v294, 7
      %v296 = vsub.s32 3, %v295
      %v297 = vrot.slane %v211, %v296
      %v298 = vlaneseq
      %v299 = vshrl.u32 %v298, 7
      %v300 = vsub.s32 7, %v299
      %v301 = vrot.slane %v211, %v300
      %v304 = vlaneseq
      %v305 = vshrl.u32 %v304, 7
      %v306 = vsub.s32 3, %v305
      %v307 = vrot.slane %v297, %v306
      %v308 = vlaneseq
      %v309 = vshrl.u32 %v308, 7
      %v310 = vsub.s32 3, %v309
      %v311 = vrot.slane %v301, %v310
      %v312 = vmul.f32 %v292, %v307
      %v313 = vmul.f32 %v292, %v311
      %v314 = vadd.f32 %v288, %v312
      %v315 = vadd.f32 %v289, %v313
      %v316 = vld [vmem:[%s2] sm:$0xff]
      %318 = vset.pattern.permute.xlu0 0
      %319 = vperm.xlu0 %318, %v316
      %v320 = vpop.permute.xlu0 %319
      %v322 = vadd.f32 %v314, %v320
      %v323 = vadd.f32 %v315, %v320
      %v324 = vmax.f32 %v322, 0.0
      %v325 = vmax.f32 %v323, 0.0
      %326 = vst [vmem:[%s208] sm:$0xff] %v324
      %327 = vst [vmem:[%s208 + $0x8] sm:$0xff] %v325
      %s328 = smul.u32 2, %s19
      %p329 = scmp.lt.s32.totalorder %s18, 1
      %s330 = scalar_select %p329, %s18, 1
      %p331 = scmp.lt.s32.totalorder %s328, 1
      %s332 = scalar_select %p331, %s328, 1
      %s333 = smul.addr %s330, 2
      %s334 = sadd.s32 %s332, %s333
      %s335 = smul.addr %s334, 8
      %s336 = scalar_lea.vmem %s3, %s335
      // Predicated region
      $region33: #{lin_forward.3} parent=31 // pred_check
        %p337 = pneg %p116
      $region34: #{lin_forward.3} parent=31 // pred_check_branch
        %339 = sbr.rel (%p337) target = $region36
      $region35: #{lin_forward.3} parent=31 // pred_region
        %s340 = smul.u32 2, %s19
      $region36: #{lin_forward.3} parent=31 // pred_fallthru
        _
    $region32: #{lin_forward.3} parent=5 // pred_fallthru
      _
    %p341 = scmp.le.s32.totalorder 2, %s9
    // Predicated region
    $region37: #{lin_forward.3} parent=5 // pred_check
      %p342 = pneg %p341
    $region38: #{lin_forward.3} parent=5 // pred_check_branch
      %344 = sbr.rel (%p342) target = $region40
    $region39: #{lin_forward.3} parent=5 // pred_region
      %s345 = ssub.s32 %s9, 2
      // Predicated region
      $region41: #{lin_forward.3} parent=39 // pred_check
        %p346 = pneg %p122
      $region42: #{lin_forward.3} parent=39 // pred_check_branch
        %348 = sbr.rel (%p346) target = $region44
      $region43: #{lin_forward.3} parent=39 // pred_region
        %s349 = smul.u32 2, %s21
        %p350 = scmp.lt.s32.totalorder %s20, 1
        %s351 = scalar_select %p350, %s20, 1
        %p352 = scmp.lt.s32.totalorder %s349, 1
        %s353 = scalar_select %p352, %s349, 1
        %s354 = smul.addr %s351, 2
        %s355 = sadd.s32 %s353, %s354
        %s356 = smul.addr %s355, 8
        %s357 = scalar_lea.vmem %s3, %s356
      $region44: #{lin_forward.3} parent=39 // pred_fallthru
        _
    $region40: #{lin_forward.3} parent=5 // pred_fallthru
      _
  $region6: #{lin_forward.3} parent=0 // loop_footer
    %s13 = sadd.s32 1, %s9
  $region7: #{lin_forward.3} parent=0 // loop_footer_branch
    %8 = sbr.rel target = $region3
  $region8: #{lin_forward.3} parent=0 // loop_exit
    _

</llo_original>
